<compile_context>
chip_gen: v6e
topology: v6e:2x2x1
jax: 0.10.0
libtpu: 0.0.40
codegen_flags: <defaults>
</compile_context>

<pallas_src>
import math
import re

import jax
import jax.numpy as jnp
from jax.experimental import pallas as pl
from jax.experimental.pallas import tpu as pltpu


def _tpu_generation():
    """Best-effort TPU generation (5, 6, 7, ...) from the device kind string."""
    try:
        kind = jax.devices()[0].device_kind.lower()
    except Exception:
        return None
    m = re.search(r"(\d+)", kind)
    return int(m.group(1)) if m else None


def _pick_tile(dim, cap, quantum):
    """Tile size for `dim`: a multiple of `quantum`, at most ~cap.

    Prefers an exact divisor of `dim` (no partial blocks); otherwise returns
    the largest capped multiple of `quantum` and the caller uses a pl.cdiv
    grid (partial final block -- safe for a pure elementwise kernel).
    If dim <= quantum the full dimension is used (blocks equal to the full
    array dim are exempt from the (8, 128) divisibility rule).
    """
    if dim <= quantum:
        return dim
    cap = max(quantum, min(dim, cap))
    best = (cap // quantum) * quantum
    t = best
    while t >= quantum:
        if dim % t == 0:
            return t
        t -= quantum
    return best


def _make_kernel(widen, fuse_residual):
    if fuse_residual:
        def kernel(z_ref, m_ref, r_ref, o_ref):
            z, m, r = z_ref[...], m_ref[...], r_ref[...]
            if widen:  # v5e: no bf16 VALU -> widen sub-32-bit inputs to f32
                z = z.astype(jnp.float32)
                m = m.astype(jnp.float32)
                r = r.astype(jnp.float32)
            o_ref[...] = (z * m + r).astype(o_ref.dtype)
    else:
        def kernel(z_ref, m_ref, o_ref):
            z, m = z_ref[...], m_ref[...]
            if widen:
                z = z.astype(jnp.float32)
                m = m.astype(jnp.float32)
            o_ref[...] = (z * m).astype(o_ref.dtype)
    return kernel


def dropout_columnwise(z_ij, p, key, training=True, residual=None):
    """Columnwise dropout on z_ij: (N_batch, N_res, N_res, c_z).

    If `residual` is given, returns `residual + dropout(z_ij)` fused in the
    same HBM pass (Evoformer pattern `z = z + Dropout(update)`).
    """
    if (not training) or p == 0.0:
        return z_ij if residual is None else residual + z_ij
    if p >= 1.0:
        # The literal torch expression would give 0/0 = NaN; standard dropout
        # semantics with p=1 drop everything.
        out = jnp.zeros_like(z_ij)
        return out if residual is None else residual + out

    n_batch, n_res_i, n_res_j, c_z = z_ij.shape
    keep_prob = 1.0 - p
    dtype = z_ij.dtype
    itemsize = jnp.dtype(dtype).itemsize

    gen = _tpu_generation()
    # v6e/v7x have a bf16 VALU -> multiply natively; v5e (and unknown) widens.
    widen = itemsize < 4 and not (gen is not None and gen >= 6)
    mask_dtype = jnp.float32 if widen else dtype

    # Block-size / VMEM targets per generation.
    if gen is not None and gen >= 7:
        target_bytes, vmem_limit = 4 << 20, 48 << 20   # 3.2 TB/s HBM, 64 MiB VMEM
    elif gen is not None and gen >= 5:
        target_bytes, vmem_limit = 2 << 20, 64 << 20   # 128 MiB physical VMEM
    else:
        target_bytes, vmem_limit = 1 << 20, None       # unknown chip: stay small

    # --- column-constant mask: one Bernoulli per (batch, i, channel) ---------
    keep = jax.random.bernoulli(key, p=keep_prob, shape=(n_batch, n_res_i, c_z))
    mask = (keep.astype(jnp.float32) * jnp.float32(1.0 / keep_prob)).astype(mask_dtype)

    # --- lane-dense folded layout: (N_batch*N_res_i, N_res_j*c_z) ------------
    rows = n_batch * n_res_i
    total_cols = n_res_j * c_z
    z2 = z_ij.reshape(rows, total_cols)

    sub_q = {4: 8, 2: 16, 1: 32}.get(itemsize, 8)      # sublane packing quantum
    lane_q = c_z * 128 // math.gcd(c_z, 128)           # lcm(c_z,128): whole
                                                        # columns AND lane-aligned
    ti = _pick_tile(rows, 256, sub_q)
    target_cols = max(lane_q, (target_bytes // itemsize) // max(ti, 1))
    tjc = _pick_tile(total_cols, target_cols, lane_q)
    # Cap pathological blocks (huge lcm(c_z,128), e.g. prime c_z) at ~8 MiB.
    max_bytes = 8 << 20
    if ti * tjc * itemsize > max_bytes and ti > sub_q:
        ti = _pick_tile(rows, max(sub_q, max_bytes // (tjc * itemsize)), sub_q)

    # Replicate the (.., c_z) mask across the column positions of ONE block.
    # TODO(synk): generate the mask in-kernel with pltpu.prng_seed /
    # prng_random_bits (seeded from scalar-prefetched (seed, row-tile)) to
    # remove this input entirely; host-side kept so interpret-mode tests work.
    reps = tjc // c_z
    mask2 = jnp.tile(mask.reshape(rows, c_z), (1, reps))        # (rows, tjc)

    grid = (pl.cdiv(rows, ti), pl.cdiv(total_cols, tjc))

    in_arrays = [z2, mask2]
    in_specs = [
        pl.BlockSpec((ti, tjc), lambda i, j: (i, j)),
        # j-invariant index_map: the pipeliner skips repeat fetches, so the
        # mask block is DMA'd once per row tile.
        # TODO(synk): pipeline_mode=pl.Buffered(1) would also drop its second
        # VMEM buffer; omitted to keep lowering maximally portable.
        pl.BlockSpec((ti, tjc), lambda i, j: (i, 0)),
    ]
    if residual is not None:
        in_arrays.append(residual.astype(dtype).reshape(rows, total_cols))
        in_specs.append(pl.BlockSpec((ti, tjc), lambda i, j: (i, j)))

    cp_kwargs = dict(dimension_semantics=("parallel", "parallel"))
    if vmem_limit is not None:
        cp_kwargs["vmem_limit_bytes"] = int(vmem_limit)

    out2 = pl.pallas_call(
        _make_kernel(widen, residual is not None),
        out_shape=jax.ShapeDtypeStruct((rows, total_cols), dtype),
        grid=grid,
        in_specs=in_specs,
        out_specs=pl.BlockSpec((ti, tjc), lambda i, j: (i, j)),
        compiler_params=pltpu.CompilerParams(**cp_kwargs),
    )(*in_arrays)

    return out2.reshape(z_ij.shape)


if __name__ == "__main__":
    key = jax.random.PRNGKey(0)
    k_data, k_drop, k_res = jax.random.split(key, 3)

    N_batch, N_res, c_z = 2, 16, 32
    p = 0.25

    z_ij = jax.random.normal(k_data, (N_batch, N_res, N_res, c_z), dtype=jnp.float32)

    # --- plain dropout, f32 (exact vs reference) ------------------------------
    out = jax.block_until_ready(dropout_columnwise(z_ij, p=p, key=k_drop, training=True))
    assert out.shape == z_ij.shape and out.dtype == z_ij.dtype

    keep_ref = jax.random.bernoulli(k_drop, p=1.0 - p, shape=(N_batch, N_res, c_z))
    mask_ref = keep_ref.astype(jnp.float32) / (1.0 - p)
    expected = z_ij * mask_ref[:, :, None, :]
    assert bool(jnp.max(jnp.abs(out - expected)) < 1e-5), "f32 mismatch vs reference"

    # --- fused residual add ----------------------------------------------------
    res = jax.random.normal(k_res, z_ij.shape, dtype=jnp.float32)
    out_fused = jax.block_until_ready(
        dropout_columnwise(z_ij, p=p, key=k_drop, training=True, residual=res))
    assert bool(jnp.max(jnp.abs(out_fused - (res + expected))) < 1e-5), "fused mismatch"

    # --- bf16 path (native bf16 multiply on v6e/v7x, f32 widen on v5e) --------
    z_bf16 = z_ij.astype(jnp.bfloat16)
    out_bf16 = jax.block_until_ready(
        dropout_columnwise(z_bf16, p=p, key=k_drop, training=True))
    exp_bf16 = z_bf16.astype(jnp.float32) * mask_ref[:, :, None, :]
    assert bool(jnp.max(jnp.abs(out_bf16.astype(jnp.float32) - exp_bf16)) < 0.1), "bf16 mismatch"

    # --- passthrough / edge cases ----------------------------------------------
    assert bool(jnp.all(dropout_columnwise(z_ij, p=p, key=k_drop, training=False) == z_ij))
    assert bool(jnp.all(dropout_columnwise(z_ij, p=0.0, key=k_drop, training=True) == z_ij))
    assert bool(jnp.all(dropout_columnwise(z_ij, p=1.0, key=k_drop, training=True) == 0.0))

    print("KERNEL_OK")
</pallas_src>

<mosaic_0001>
module attributes {stable_mosaic.version = 11 : i64} {
  func.func @kernel(%arg0: i32, %arg1: i32, %arg2: memref<32x512xf32, #tpu.memory_space<vmem>>, %arg3: memref<32x512xf32, #tpu.memory_space<vmem>>, %arg4: memref<32x512xf32, #tpu.memory_space<vmem>>) attributes {dimension_semantics = [#tpu.dimension_semantics<parallel>, #tpu.dimension_semantics<parallel>], iteration_bounds = array<i64: 1, 1>, scalar_prefetch = 0 : i64, scratch_operands = 0 : i64, tpu.core_type = #tpu.core_type<tc>, window_params = [{transform_indices = @transform_0, window_bounds = array<i64: 32, 512>}, {transform_indices = @transform_1, window_bounds = array<i64: 32, 512>}, {transform_indices = @transform_2, window_bounds = array<i64: 32, 512>}]} {
    %c0 = arith.constant 0 : index
    %c0_0 = arith.constant 0 : index
    %0 = vector.load %arg2[%c0, %c0_0] : memref<32x512xf32, #tpu.memory_space<vmem>>, vector<32x512xf32>
    %c0_1 = arith.constant 0 : index
    %c0_2 = arith.constant 0 : index
    %1 = vector.load %arg3[%c0_1, %c0_2] : memref<32x512xf32, #tpu.memory_space<vmem>>, vector<32x512xf32>
    %2 = arith.mulf %0, %1 : vector<32x512xf32>
    %c0_3 = arith.constant 0 : index
    %c0_4 = arith.constant 0 : index
    %3 = vector.load %arg4[%c0_3, %c0_4] : memref<32x512xf32, #tpu.memory_space<vmem>>, vector<32x512xf32>
    tpu.vector_store %arg4[%c0_3, %c0_4], %2 {strides = array<i32>} : memref<32x512xf32, #tpu.memory_space<vmem>>, vector<32x512xf32>,
    return
  }
  func.func @transform_0(%arg0: i32, %arg1: i32) -> (i32, i32) {
    %c0_i32 = arith.constant 0 : i32
    return %arg0, %arg1 : i32, i32
  }
  func.func @transform_1(%arg0: i32, %arg1: i32) -> (i32, i32) {
    %c0_i32 = arith.constant 0 : i32
    %c0_i32_0 = arith.constant 0 : i32
    return %arg0, %c0_i32 : i32, i32
  }
  func.func @transform_2(%arg0: i32, %arg1: i32) -> (i32, i32) {
    %c0_i32 = arith.constant 0 : i32
    return %arg0, %arg1 : i32, i32
  }
}

</mosaic_0001>

<llo_original>
// kernel: tpu_custom_call.1
$region0: #{tpu_custom_call.1}
  #allocation0 [shape = 'u32[]', space=smem, size = 0x4, offset = 0x4, fixed_abs, tag = 'smem constant byte address 0x4 - core index']
  #allocation1 [shape = 'u32[144,128]{1,0:T(1,128)}', space=vmem, size = 0x12000, scoped, tag = 'internal scratch']
  %s0 = inlined_call_operand.hbm [shape: f32[32,512], index: 0, kind: input, shape index: {}]
  %s1 = inlined_call_operand.hbm [shape: f32[32,512], index: 1, kind: input, shape index: {}]
  %s2 = inlined_call_operand.hbm [shape: f32[32,512], index: 2, kind: output, shape index: {}]
  %s3 = sld [smem:[#allocation0]]
  $region26: #{tpu_custom_call.1} parent=0
    _
  %s5 = ssub.s32 1, %s3
  %s6 = scalar_select 0, %s5, %s3
  $region1: #{tpu_custom_call.1} parent=0
    #allocation2 [shape = 'u8[65536]{0}', space=vmem, size = 0x10000, scoped, tag = 'input window, operand 0, single buffered']
    #allocation3 [shape = 's32[1]{0}', space=sflag, size = 0x4, scoped, tag = 'scoped memory for tpu_custom_call.1']
    #allocation4 [shape = 's32[1]{0}', space=sflag, size = 0x4, scoped, tag = 'scoped memory for tpu_custom_call.1']
    #allocation5 [shape = 'u8[65536]{0}', space=vmem, size = 0x10000, scoped, tag = 'input window, operand 1, single buffered']
    #allocation6 [shape = 's32[1]{0}', space=sflag, size = 0x4, scoped, tag = 'scoped memory for tpu_custom_call.1']
    #allocation7 [shape = 'u8[65536]{0}', space=vmem, size = 0x10000, scoped, tag = 'output window, operand 0, single buffered']
    %7 = vsyncpa [#allocation3], 0
    %8 = vsyncpa [#allocation6], 0
    %9 = vsyncpa [#allocation4], 0
    // Predicated region
    $region2: #{tpu_custom_call.1} parent=1 // pred_check
      _
    $region3: #{tpu_custom_call.1} parent=1 // pred_check_branch
      %11 = sbr.rel (0) target = $region5
    $region4: #{tpu_custom_call.1} parent=1 // pred_region
      %s13 = ssub.s32 2048, 2048
      %14 = vsyncadd [#allocation3], %s13
      %s15 = sshll.u32 [#allocation2], 4
      %s16 = int_to_ptr.vmem [resolvable:$true] %s15
      %21 = dma.hbm_to_vmem [thread:$0]  %s0, 2048, %s16, [#allocation3], 512, 512, 32
    $region5: #{tpu_custom_call.1} parent=1 // pred_fallthru
      _
    // Predicated region
    $region6: #{tpu_custom_call.1} parent=1 // pred_check
      _
    $region7: #{tpu_custom_call.1} parent=1 // pred_check_branch
      %23 = sbr.rel (0) target = $region9
    $region8: #{tpu_custom_call.1} parent=1 // pred_region
      %s25 = ssub.s32 2048, 2048
      %26 = vsyncadd [#allocation6], %s25
      %s27 = sshll.u32 [#allocation5], 4
      %s28 = int_to_ptr.vmem [resolvable:$true] %s27
      %33 = dma.hbm_to_vmem [thread:$0]  %s1, 2048, %s28, [#allocation6], 512, 512, 32
    $region9: #{tpu_custom_call.1} parent=1 // pred_fallthru
      _
    // Predicated region
    $region10: #{tpu_custom_call.1} parent=1 // pred_check
      _
    $region11: #{tpu_custom_call.1} parent=1 // pred_check_branch
      %35 = sbr.rel (0) target = $region13
    $region12: #{tpu_custom_call.1} parent=1 // pred_region
      %36 = dma.done [#allocation3], 2048
    $region13: #{tpu_custom_call.1} parent=1 // pred_fallthru
      _
    // Predicated region
    $region14: #{tpu_custom_call.1} parent=1 // pred_check
      _
    $region15: #{tpu_custom_call.1} parent=1 // pred_check_branch
      %38 = sbr.rel (0) target = $region17
    $region16: #{tpu_custom_call.1} parent=1 // pred_region
      %39 = dma.done [#allocation6], 2048
    $region17: #{tpu_custom_call.1} parent=1 // pred_fallthru
      _
    %v40 = vld [vmem:[#allocation2] sm:$0xff]
    %v41 = vld [vmem:[#allocation2 + $0x8] sm:$0xff]
    %v42 = vld [vmem:[#allocation2 + $0x10] sm:$0xff]
    %v43 = vld [vmem:[#allocation2 + $0x18] sm:$0xff]
    %v44 = vld [vmem:[#allocation2 + $0x20] sm:$0xff]
    %v45 = vld [vmem:[#allocation2 + $0x28] sm:$0xff]
    %v46 = vld [vmem:[#allocation2 + $0x30] sm:$0xff]
    %v47 = vld [vmem:[#allocation2 + $0x38] sm:$0xff]
    %v48 = vld [vmem:[#allocation2 + $0x40] sm:$0xff]
    %v49 = vld [vmem:[#allocation2 + $0x48] sm:$0xff]
    %v50 = vld [vmem:[#allocation2 + $0x50] sm:$0xff]
    %v51 = vld [vmem:[#allocation2 + $0x58] sm:$0xff]
    %v52 = vld [vmem:[#allocation2 + $0x60] sm:$0xff]
    %v53 = vld [vmem:[#allocation2 + $0x68] sm:$0xff]
    %v54 = vld [vmem:[#allocation2 + $0x70] sm:$0xff]
    %v55 = vld [vmem:[#allocation2 + $0x78] sm:$0xff]
    %v56 = vld [vmem:[#allocation5] sm:$0xff]
    %v57 = vld [vmem:[#allocation5 + $0x8] sm:$0xff]
    %v58 = vld [vmem:[#allocation5 + $0x10] sm:$0xff]
    %v59 = vld [vmem:[#allocation5 + $0x18] sm:$0xff]
    %v60 = vld [vmem:[#allocation5 + $0x20] sm:$0xff]
    %v61 = vld [vmem:[#allocation5 + $0x28] sm:$0xff]
    %v62 = vld [vmem:[#allocation5 + $0x30] sm:$0xff]
    %v63 = vld [vmem:[#allocation5 + $0x38] sm:$0xff]
    %v64 = vld [vmem:[#allocation5 + $0x40] sm:$0xff]
    %v65 = vld [vmem:[#allocation5 + $0x48] sm:$0xff]
    %v66 = vld [vmem:[#allocation5 + $0x50] sm:$0xff]
    %v67 = vld [vmem:[#allocation5 + $0x58] sm:$0xff]
    %v68 = vld [vmem:[#allocation5 + $0x60] sm:$0xff]
    %v69 = vld [vmem:[#allocation5 + $0x68] sm:$0xff]
    %v70 = vld [vmem:[#allocation5 + $0x70] sm:$0xff]
    %v71 = vld [vmem:[#allocation5 + $0x78] sm:$0xff]
    %v72 = vmul.f32 %v40, %v56
    %v73 = vmul.f32 %v41, %v57
    %v74 = vmul.f32 %v42, %v58
    %v75 = vmul.f32 %v43, %v59
    %v76 = vmul.f32 %v44, %v60
    %v77 = vmul.f32 %v45, %v61
    %v78 = vmul.f32 %v46, %v62
    %v79 = vmul.f32 %v47, %v63
    %v80 = vmul.f32 %v48, %v64
    %v81 = vmul.f32 %v49, %v65
    %v82 = vmul.f32 %v50, %v66
    %v83 = vmul.f32 %v51, %v67
    %v84 = vmul.f32 %v52, %v68
    %v85 = vmul.f32 %v53, %v69
    %v86 = vmul.f32 %v54, %v70
    %v87 = vmul.f32 %v55, %v71
    %88 = vst [vmem:[#allocation7] sm:$0xff] %v72
    %89 = vst [vmem:[#allocation7 + $0x8] sm:$0xff] %v73
    %90 = vst [vmem:[#allocation7 + $0x10] sm:$0xff] %v74
    %91 = vst [vmem:[#allocation7 + $0x18] sm:$0xff] %v75
    %92 = vst [vmem:[#allocation7 + $0x20] sm:$0xff] %v76
    %93 = vst [vmem:[#allocation7 + $0x28] sm:$0xff] %v77
    %94 = vst [vmem:[#allocation7 + $0x30] sm:$0xff] %v78
    %95 = vst [vmem:[#allocation7 + $0x38] sm:$0xff] %v79
    %96 = vst [vmem:[#allocation7 + $0x40] sm:$0xff] %v80
    %97 = vst [vmem:[#allocation7 + $0x48] sm:$0xff] %v81
    %98 = vst [vmem:[#allocation7 + $0x50] sm:$0xff] %v82
    %99 = vst [vmem:[#allocation7 + $0x58] sm:$0xff] %v83
    %100 = vst [vmem:[#allocation7 + $0x60] sm:$0xff] %v84
    %101 = vst [vmem:[#allocation7 + $0x68] sm:$0xff] %v85
    %102 = vst [vmem:[#allocation7 + $0x70] sm:$0xff] %v86
    %103 = vst [vmem:[#allocation7 + $0x78] sm:$0xff] %v87
    // Predicated region
    $region18: #{tpu_custom_call.1} parent=1 // pred_check
      _
    $region19: #{tpu_custom_call.1} parent=1 // pred_check_branch
      %105 = sbr.rel (0) target = $region21
    $region20: #{tpu_custom_call.1} parent=1 // pred_region
      %s107 = ssub.s32 2048, 2048
      %108 = vsyncadd [#allocation4], %s107
      %s109 = sshll.u32 [#allocation7], 4
      %s110 = int_to_ptr.vmem [resolvable:$true] %s109
      %115 = dma.vmem_to_hbm [thread:$0]  %s110, 2048, %s2, [#allocation4], 512, 512, 32
    $region21: #{tpu_custom_call.1} parent=1 // pred_fallthru
      _
    // Predicated region
    $region22: #{tpu_custom_call.1} parent=1 // pred_check
      _
    $region23: #{tpu_custom_call.1} parent=1 // pred_check_branch
      %117 = sbr.rel (0) target = $region25
    $region24: #{tpu_custom_call.1} parent=1 // pred_region
      %118 = dma.done [#allocation4], 2048
    $region25: #{tpu_custom_call.1} parent=1 // pred_fallthru
      _
    %119 = vsyncpa [#allocation3], 1
    %120 = vsyncpa [#allocation6], 1
    %121 = vsyncpa [#allocation4], 1

</llo_original>
